<compile_context>
chip_gen: v6e
topology: v6e:2x2x1
jax: 0.10.0
libtpu: 0.0.40
codegen_flags: <defaults>
</compile_context>

<pallas_src>
import jax
import jax.numpy as jnp
import numpy as np
from jax import lax
from jax.experimental import pallas as pl
from jax.experimental.pallas import tpu as pltpu


def _round_up(x: int, m: int) -> int:
    return ((x + m - 1) // m) * m


# --------------------------------------------------------------------------------------
# Fast path: small num_outputs (QM9: O == 1). Everything lane-dense, no MXU.
# --------------------------------------------------------------------------------------
def _postproc_kernel_small_o(scale_ref, shift_ref, atom_refs_ref,
                             contrib_ref, atoms_ref, gidx_ref,
                             out_ref, giota_ref):
    """One node tile (lane-dense VPU path).

    scale_ref/shift_ref : [O, 1]        f32 (VMEM, grid-invariant, broadcast over lanes)
    atom_refs_ref       : [T, 1]        f32 (VMEM, grid-invariant)
    contrib_ref         : [O, TILE_N]   f32 (VMEM, lane-dense, streamed)
    atoms_ref/gidx_ref  : [1, TILE_N]   i32 (VMEM, lane-dense, streamed)
    out_ref             : [G, O]        f32 (VMEM resident accumulator)
    giota_ref           : [G, TILE_N]   i32 scratch (graph-row iota, filled once)
    """
    num_types = atom_refs_ref.shape[0]
    num_outputs, tile_n = contrib_ref.shape

    @pl.when(pl.program_id(0) == 0)
    def _init():
        out_ref[...] = jnp.zeros_like(out_ref)
        giota_ref[...] = lax.broadcasted_iota(jnp.int32, giota_ref.shape, 0)

    # Atom-reference lookup (VPU compare/select against a type iota + T-deep sublane sum).
    atoms = atoms_ref[...]                                                  # [1, TILE_N]
    t_iota = lax.broadcasted_iota(jnp.int32, (num_types, tile_n), 0)        # [T, TILE_N]
    refs_row = jnp.sum(
        jnp.where(atoms == t_iota, atom_refs_ref[...], 0.0),
        axis=0, keepdims=True)                                              # [1, TILE_N]

    # Fused scale / shift / atom refs, all lane-dense (one [O, TILE_N] pass).
    x = contrib_ref[...] * scale_ref[...] + shift_ref[...] + refs_row       # [O, TILE_N]

    # Graph one-hot directly in [G, TILE_N] orientation against the cached iota.
    onehot_b = gidx_ref[...] == giota_ref[...]                              # [G, TILE_N]

    # Segment sum via select + lane reduce (no MXU; O is tiny).
    if num_outputs == 1:
        seg = jnp.sum(jnp.where(onehot_b, x, 0.0), axis=1, keepdims=True)   # [G, 1]
    else:
        o_iota = lax.broadcasted_iota(jnp.int32, (1, num_outputs), 1)       # [1, O]
        seg = jnp.zeros(out_ref.shape, jnp.float32)
        for o in range(num_outputs):                                        # static unroll
            col = jnp.sum(jnp.where(onehot_b, x[o:o + 1, :], 0.0),
                          axis=1, keepdims=True)                            # [G, 1]
            seg = seg + jnp.where(o_iota == o, col, 0.0)                    # [G, O]

    out_ref[...] = out_ref[...] + seg


# --------------------------------------------------------------------------------------
# General path: large num_outputs. Segment sum on the MXU (verified previously).
# --------------------------------------------------------------------------------------
def _postproc_kernel_mxu(scale_ref, shift_ref, atom_refs_ref,
                         contrib_ref, atoms_ref, gidx_ref,
                         out_ref, giota_ref):
    """One node tile (MXU path, O > 8).

    scale_ref/shift_ref : [1, O]        f32
    atom_refs_ref       : [T, 1]        f32
    contrib_ref         : [TILE_N, O]   f32 (streamed)
    atoms_ref/gidx_ref  : [1, TILE_N]   i32 (lane-dense, streamed)
    out_ref             : [G, O]        f32 (resident accumulator)
    giota_ref           : [G, TILE_N]   i32 scratch
    """
    num_types = atom_refs_ref.shape[0]
    tile_n = atoms_ref.shape[1]

    @pl.when(pl.program_id(0) == 0)
    def _init():
        out_ref[...] = jnp.zeros_like(out_ref)
        giota_ref[...] = lax.broadcasted_iota(jnp.int32, giota_ref.shape, 0)

    # Scale / shift (VPU).
    x = contrib_ref[...] * scale_ref[...] + shift_ref[...]                  # [TILE_N, O]

    # Atom-reference lookup on the VPU (no [N, T] one-hot matmul).
    atoms = atoms_ref[...]                                                  # [1, TILE_N]
    t_iota = lax.broadcasted_iota(jnp.int32, (num_types, tile_n), 0)        # [T, TILE_N]
    refs_row = jnp.sum(
        jnp.where(atoms == t_iota, atom_refs_ref[...], 0.0),
        axis=0, keepdims=True)                                              # [1, TILE_N]

    # Graph one-hot in [G, TILE_N] orientation (MXU-natural LHS).
    gidx = gidx_ref[...]                                                    # [1, TILE_N]
    onehot_b = gidx == giota_ref[...]                                       # [G, TILE_N]
    onehot_f = onehot_b.astype(jnp.float32)

    # Segment-sum of scaled contributions on the MXU: [G, TILE_N] @ [TILE_N, O].
    seg = jnp.dot(onehot_f, x, preferred_element_type=jnp.float32)          # [G, O]
    # Per-graph atom-reference sum (VPU select + lane reduce, broadcast over O).
    refs_per_graph = jnp.sum(jnp.where(onehot_b, refs_row, 0.0),
                             axis=1, keepdims=True)                         # [G, 1]

    out_ref[...] = out_ref[...] + seg + refs_per_graph


# --------------------------------------------------------------------------------------
# Wrapper
# --------------------------------------------------------------------------------------
def atomwise_post_processing(atomic_contributions, atoms, graph_indexes,
                             scale, shift, atom_refs, num_graphs, *, tile_n=None):
    """Fused Pallas forward of AtomwisePostProcessing.

    Args:
      atomic_contributions: f32 [num_nodes, num_outputs]
      atoms:                int  [num_nodes], values in [0, num_atom_types)
      graph_indexes:        int  [num_nodes], values in [0, num_graphs)
      scale, shift:         f32 scalar or [num_outputs] (std / mean buffers)
      atom_refs:            f32 [num_atom_types, 1]
      num_graphs:           static int (torch derives it with torch.unique at runtime)
      tile_n:               optional node-tile size (multiple of 128)

    Returns:
      f32 [num_graphs, num_outputs]
    """
    contrib = jnp.asarray(atomic_contributions, jnp.float32)
    num_nodes, num_outputs = contrib.shape
    atom_refs_col = jnp.asarray(atom_refs, jnp.float32).reshape(-1, 1)
    num_types = atom_refs_col.shape[0]

    scale_vec = jnp.broadcast_to(
        jnp.asarray(scale, jnp.float32).reshape(-1), (num_outputs,))
    shift_vec = jnp.broadcast_to(
        jnp.asarray(shift, jnp.float32).reshape(-1), (num_outputs,))
    atoms_row = jnp.asarray(atoms, jnp.int32).reshape(1, num_nodes)
    gidx_row = jnp.asarray(graph_indexes, jnp.int32).reshape(1, num_nodes)

    small_o = num_outputs <= 8            # QM9 case is O == 1

    g_sub = _round_up(num_graphs, 8)
    o_sub = _round_up(num_outputs, 8)
    o_lanes = _round_up(num_outputs, 128)
    t_sub = _round_up(num_types, 8)

    # Generation-aware VMEM budget: 128 MiB parts (v5e/v6e) get larger tiles; 64 MiB
    # parts (v7x) keep conservative caps. Falls back to the conservative numbers if the
    # hardware query is unavailable.
    try:
        info_fn = getattr(pltpu, "get_tpu_info", None)
        vmem_cap = int(info_fn().vmem_capacity_bytes) if info_fn is not None else (64 << 20)
    except Exception:
        vmem_cap = 64 << 20
    if vmem_cap >= (96 << 20):
        tile_budget, tile_cap = 28 << 20, 8192      # v5e / v6e (128 MiB VMEM)
    else:
        tile_budget, tile_cap = 12 << 20, 2048      # v7x (64 MiB VMEM) / unknown

    def _footprint(tn: int) -> int:
        """Padded-layout VMEM estimate for one grid step (double-buffered inputs)."""
        idx_rows = 2 * 2 * 8 * tn * 4                    # atoms + gidx rows (x2 buffers)
        giota = g_sub * tn * 4                           # graph-iota scratch
        acc = 2 * g_sub * o_lanes * 4                    # resident output accumulator
        consts = 2 * o_sub * 128 * 4 + t_sub * 128 * 4   # scale, shift, atom_refs
        if small_o:
            contrib_buf = 2 * o_sub * tn * 4             # lane-dense contrib (x2 buffers)
            temps = (3 * g_sub + 2 * o_sub + 8) * tn * 4  # onehot/select temps + x + refs
        else:
            contrib_buf = 2 * tn * o_lanes * 4           # [TILE_N, O] contrib (x2 buffers)
            temps = 4 * g_sub * tn * 4 + tn * o_lanes * 4  # onehot f32/bool/select + x
        return contrib_buf + idx_rows + giota + acc + consts + temps

    if tile_n is None:
        tile_n = min(tile_cap, _round_up(num_nodes, 128))
        while tile_n > 128 and _footprint(tile_n) > tile_budget:
            tile_n = max(128, _round_up(tile_n // 2, 128))
    assert tile_n % 128 == 0, "tile_n must be a multiple of 128"

    # Pad the node axis so the grid tiles it exactly. Padded nodes get graph id ==
    # num_graphs (out of range), so they match no one-hot row and contribute zero.
    n_pad = _round_up(num_nodes, tile_n)
    pad = n_pad - num_nodes
    if pad:
        contrib = jnp.pad(contrib, ((0, pad), (0, 0)))
        atoms_row = jnp.pad(atoms_row, ((0, 0), (0, pad)))
        gidx_row = jnp.pad(gidx_row, ((0, 0), (0, pad)), constant_values=num_graphs)

    grid = (n_pad // tile_n,)
    vmem_limit = int(min(max(_footprint(tile_n) + (2 << 20), 8 << 20),
                         (vmem_cap * 3) // 4))

    if small_o:
        kernel = _postproc_kernel_small_o
        contrib_in = contrib.T                                  # [O, n_pad] lane-dense
        scale_in = scale_vec.reshape(num_outputs, 1)
        shift_in = shift_vec.reshape(num_outputs, 1)
        contrib_spec = pl.BlockSpec((num_outputs, tile_n), lambda i: (0, i))
        scale_spec = pl.BlockSpec((num_outputs, 1), lambda i: (0, 0))
        shift_spec = pl.BlockSpec((num_outputs, 1), lambda i: (0, 0))
        flops = int(n_pad * num_outputs * (num_graphs + 3) + n_pad * num_types)
    else:
        kernel = _postproc_kernel_mxu
        contrib_in = contrib                                    # [n_pad, O]
        scale_in = scale_vec.reshape(1, num_outputs)
        shift_in = shift_vec.reshape(1, num_outputs)
        contrib_spec = pl.BlockSpec((tile_n, num_outputs), lambda i: (i, 0))
        scale_spec = pl.BlockSpec((1, num_outputs), lambda i: (0, 0))
        shift_spec = pl.BlockSpec((1, num_outputs), lambda i: (0, 0))
        flops = int(2 * n_pad * num_graphs * num_outputs
                    + 2 * n_pad * num_outputs + n_pad * num_types)

    cost = pl.CostEstimate(
        flops=flops,
        transcendentals=0,
        bytes_accessed=int(4 * (n_pad * num_outputs + 2 * n_pad + num_types
                                + 2 * num_outputs + num_graphs * num_outputs)))

    grid_spec = pltpu.PrefetchScalarGridSpec(
        num_scalar_prefetch=0,
        grid=grid,
        in_specs=[
            scale_spec,                                           # scale
            shift_spec,                                           # shift
            pl.BlockSpec((num_types, 1), lambda i: (0, 0)),       # atom_refs
            contrib_spec,                                         # contributions
            pl.BlockSpec((1, tile_n), lambda i: (0, i)),          # atoms (lane-dense)
            pl.BlockSpec((1, tile_n), lambda i: (0, i)),          # graph ids (lane-dense)
        ],
        out_specs=pl.BlockSpec((num_graphs, num_outputs), lambda i: (0, 0)),
        scratch_shapes=[pltpu.VMEM((num_graphs, tile_n), jnp.int32)],
    )

    return pl.pallas_call(
        kernel,
        out_shape=jax.ShapeDtypeStruct((num_graphs, num_outputs), jnp.float32),
        grid_spec=grid_spec,
        compiler_params=pltpu.CompilerParams(
            dimension_semantics=("arbitrary",),                   # node axis is a reduction
            vmem_limit_bytes=vmem_limit),
        cost_estimate=cost,
    )(scale_in, shift_in, atom_refs_col, contrib_in, atoms_row, gidx_row)


def _reference(contrib, atoms, gidx, scale, shift, atom_refs, num_graphs):
    contrib = jnp.asarray(contrib, jnp.float32)
    num_outputs = contrib.shape[1]
    s = jnp.broadcast_to(jnp.asarray(scale, jnp.float32).reshape(-1), (num_outputs,))
    b = jnp.broadcast_to(jnp.asarray(shift, jnp.float32).reshape(-1), (num_outputs,))
    x = contrib * s + b
    x = x + jnp.asarray(atom_refs, jnp.float32).reshape(-1, 1)[atoms]
    return jnp.zeros((num_graphs, num_outputs), jnp.float32).at[gidx].add(x)


if __name__ == "__main__":
    key = jax.random.PRNGKey(0)
    k1, k2, k3, k4, k5 = jax.random.split(key, 5)

    # --- Case 1: QM9-like shapes (num_outputs == 1) -> lane-dense fast path, 1 tile. ---
    num_nodes, num_outputs, num_atom_types, num_graphs = 16, 1, 10, 4
    contrib = jax.random.normal(k1, (num_nodes, num_outputs), jnp.float32)
    atoms = jax.random.randint(k2, (num_nodes,), 0, num_atom_types, dtype=jnp.int32)
    gidx = jnp.array([0, 0, 0, 0, 1, 1, 1, 2, 2, 2, 2, 2, 3, 3, 3, 3], jnp.int32)
    scale = jnp.full((num_outputs,), 2.5, jnp.float32)      # std buffer
    shift = jnp.full((num_outputs,), -0.75, jnp.float32)    # mean buffer
    atom_refs = jax.random.normal(k3, (num_atom_types, 1), jnp.float32)

    out1 = jax.block_until_ready(atomwise_post_processing(
        contrib, atoms, gidx, scale, shift, atom_refs, num_graphs))
    ref1 = _reference(contrib, atoms, gidx, scale, shift, atom_refs, num_graphs)
    np.testing.assert_allclose(np.asarray(out1), np.asarray(ref1), rtol=1e-5, atol=1e-5)

    # --- Case 2: multi-tile accumulation (grid > 1), small O > 1 -> fast path. ---
    n2, o2, t2, g2 = 300, 2, 10, 5
    contrib2 = jax.random.normal(k4, (n2, o2), jnp.float32)
    atoms2 = jax.random.randint(k5, (n2,), 0, t2, dtype=jnp.int32)
    gidx2 = (jnp.arange(n2, dtype=jnp.int32) * g2) // n2     # sorted, covers all graphs
    scale2 = jnp.array([1.5, 0.5], jnp.float32)
    shift2 = jnp.array([-0.25, 0.1], jnp.float32)
    atom_refs2 = jax.random.normal(jax.random.PRNGKey(7), (t2, 1), jnp.float32)

    out2 = jax.block_until_ready(atomwise_post_processing(
        contrib2, atoms2, gidx2, scale2, shift2, atom_refs2, g2, tile_n=128))
    ref2 = _reference(contrib2, atoms2, gidx2, scale2, shift2, atom_refs2, g2)
    np.testing.assert_allclose(np.asarray(out2), np.asarray(ref2), rtol=1e-5, atol=1e-5)

    # --- Case 3: larger num_outputs -> MXU segment-sum path, multi-tile. ---
    n3, o3, t3, g3 = 200, 16, 10, 3
    kk = jax.random.split(jax.random.PRNGKey(1), 3)
    contrib3 = jax.random.normal(kk[0], (n3, o3), jnp.float32)
    atoms3 = jax.random.randint(kk[1], (n3,), 0, t3, dtype=jnp.int32)
    gidx3 = (jnp.arange(n3, dtype=jnp.int32) * g3) // n3
    scale3 = jax.random.normal(kk[2], (o3,), jnp.float32)
    shift3 = jnp.linspace(-1.0, 1.0, o3, dtype=jnp.float32)
    atom_refs3 = jax.random.normal(jax.random.PRNGKey(11), (t3, 1), jnp.float32)

    out3 = jax.block_until_ready(atomwise_post_processing(
        contrib3, atoms3, gidx3, scale3, shift3, atom_refs3, g3, tile_n=128))
    ref3 = _reference(contrib3, atoms3, gidx3, scale3, shift3, atom_refs3, g3)
    np.testing.assert_allclose(np.asarray(out3), np.asarray(ref3), rtol=1e-5, atol=1e-5)

    print("KERNEL_OK")
</pallas_src>

<mosaic_0001>
module attributes {stable_mosaic.version = 11 : i64} {
  func.func @_postproc_kernel_small_o(%arg0: i32, %arg1: memref<1x1xf32, #tpu.memory_space<vmem>>, %arg2: memref<1x1xf32, #tpu.memory_space<vmem>>, %arg3: memref<10x1xf32, #tpu.memory_space<vmem>>, %arg4: memref<1x128xf32, #tpu.memory_space<vmem>>, %arg5: memref<1x128xi32, #tpu.memory_space<vmem>>, %arg6: memref<1x128xi32, #tpu.memory_space<vmem>>, %arg7: memref<4x1xf32, #tpu.memory_space<vmem>>, %arg8: memref<4x128xi32, #tpu.memory_space<vmem>>) attributes {dimension_semantics = [#tpu.dimension_semantics<arbitrary>], iteration_bounds = array<i64: 1>, scalar_prefetch = 0 : i64, scratch_operands = 1 : i64, tpu.core_type = #tpu.core_type<tc>, window_params = [{pipeline_mode = #tpu.pipeline_mode<synchronous>, transform_indices = @transform_0, window_bounds = array<i64: 1, 1>}, {pipeline_mode = #tpu.pipeline_mode<synchronous>, transform_indices = @transform_1, window_bounds = array<i64: 1, 1>}, {pipeline_mode = #tpu.pipeline_mode<synchronous>, transform_indices = @transform_2, window_bounds = array<i64: 10, 1>}, {transform_indices = @transform_3, window_bounds = array<i64: 1, 128>}, {transform_indices = @transform_4, window_bounds = array<i64: 1, 128>}, {transform_indices = @transform_5, window_bounds = array<i64: 1, 128>}, {pipeline_mode = #tpu.pipeline_mode<synchronous>, transform_indices = @transform_6, window_bounds = array<i64: 4, 1>}]} {
    %c0_i32 = arith.constant 0 : i32
    %0 = arith.cmpi eq, %arg0, %c0_i32 : i32
    %1 = arith.extui %0 : i1 to i32
    %c0_i32_0 = arith.constant 0 : i32
    %2 = arith.cmpi ne, %1, %c0_i32_0 : i32
    scf.if %2 {
      %cst_21 = arith.constant 0.000000e+00 : f32
      %35 = vector.broadcast %cst_21 : f32 to vector<4x1xf32>
      %c0_22 = arith.constant 0 : index
      %c0_23 = arith.constant 0 : index
      %36 = vector.load %arg7[%c0_22, %c0_23] : memref<4x1xf32, #tpu.memory_space<vmem>>, vector<4x1xf32>
      tpu.vector_store %arg7[%c0_22, %c0_23], %35 {strides = array<i32>} : memref<4x1xf32, #tpu.memory_space<vmem>>, vector<4x1xf32>,
      %37 = tpu.iota {dimensions = array<i32: 0>} : vector<4x128xi32>
      %c0_24 = arith.constant 0 : index
      %c0_25 = arith.constant 0 : index
      %38 = vector.load %arg8[%c0_24, %c0_25] : memref<4x128xi32, #tpu.memory_space<vmem>>, vector<4x128xi32>
      tpu.vector_store %arg8[%c0_24, %c0_25], %37 {strides = array<i32>} : memref<4x128xi32, #tpu.memory_space<vmem>>, vector<4x128xi32>,
    } else {
    }
    %c0 = arith.constant 0 : index
    %c0_1 = arith.constant 0 : index
    %3 = vector.load %arg5[%c0, %c0_1] : memref<1x128xi32, #tpu.memory_space<vmem>>, vector<1x128xi32>
    %4 = tpu.iota {dimensions = array<i32: 0>} : vector<10x128xi32>
    %5 = vector.broadcast %3 : vector<1x128xi32> to vector<10x128xi32>
    %6 = arith.cmpi eq, %5, %4 : vector<10x128xi32>
    %c0_2 = arith.constant 0 : index
    %c0_3 = arith.constant 0 : index
    %7 = vector.load %arg3[%c0_2, %c0_3] : memref<10x1xf32, #tpu.memory_space<vmem>>, vector<10x1xf32>
    %cst = arith.constant 0.000000e+00 : f32
    %8 = vector.shape_cast %7 : vector<10x1xf32> to vector<10x1xf32>
    %9 = vector.broadcast %8 : vector<10x1xf32> to vector<10x128xf32>
    %10 = vector.broadcast %cst : f32 to vector<10x128xf32>
    %11 = arith.select %6, %9, %10 : vector<10x128xi1>, vector<10x128xf32>
    %cst_4 = arith.constant dense<0.000000e+00> : vector<128xf32>
    %12 = vector.multi_reduction <add>, %11, %cst_4 [0] : vector<10x128xf32> to vector<128xf32>
    %13 = vector.shape_cast %12 : vector<128xf32> to vector<1x128xf32>
    %c0_5 = arith.constant 0 : index
    %c0_6 = arith.constant 0 : index
    %14 = vector.load %arg4[%c0_5, %c0_6] : memref<1x128xf32, #tpu.memory_space<vmem>>, vector<1x128xf32>
    %c0_7 = arith.constant 0 : index
    %c0_8 = arith.constant 0 : index
    %15 = vector.load %arg1[%c0_7, %c0_8] : memref<1x1xf32, #tpu.memory_space<vmem>>, vector<1x1xf32>
    %16 = vector.broadcast %15 : vector<1x1xf32> to vector<1x128xf32>
    %17 = arith.mulf %14, %16 : vector<1x128xf32>
    %c0_9 = arith.constant 0 : index
    %c0_10 = arith.constant 0 : index
    %18 = vector.load %arg2[%c0_9, %c0_10] : memref<1x1xf32, #tpu.memory_space<vmem>>, vector<1x1xf32>
    %19 = vector.broadcast %18 : vector<1x1xf32> to vector<1x128xf32>
    %20 = arith.addf %17, %19 : vector<1x128xf32>
    %21 = arith.addf %20, %13 : vector<1x128xf32>
    %c0_11 = arith.constant 0 : index
    %c0_12 = arith.constant 0 : index
    %22 = vector.load %arg6[%c0_11, %c0_12] : memref<1x128xi32, #tpu.memory_space<vmem>>, vector<1x128xi32>
    %c0_13 = arith.constant 0 : index
    %c0_14 = arith.constant 0 : index
    %23 = vector.load %arg8[%c0_13, %c0_14] : memref<4x128xi32, #tpu.memory_space<vmem>>, vector<4x128xi32>
    %24 = vector.broadcast %22 : vector<1x128xi32> to vector<4x128xi32>
    %25 = arith.cmpi eq, %24, %23 : vector<4x128xi32>
    %cst_15 = arith.constant 0.000000e+00 : f32
    %26 = vector.shape_cast %21 : vector<1x128xf32> to vector<1x128xf32>
    %27 = vector.broadcast %26 : vector<1x128xf32> to vector<4x128xf32>
    %28 = vector.broadcast %cst_15 : f32 to vector<4x128xf32>
    %29 = arith.select %25, %27, %28 : vector<4x128xi1>, vector<4x128xf32>
    %cst_16 = arith.constant dense<0.000000e+00> : vector<4xf32>
    %30 = vector.multi_reduction <add>, %29, %cst_16 [1] : vector<4x128xf32> to vector<4xf32>
    %31 = vector.shape_cast %30 : vector<4xf32> to vector<4x1xf32>
    %c0_17 = arith.constant 0 : index
    %c0_18 = arith.constant 0 : index
    %32 = vector.load %arg7[%c0_17, %c0_18] : memref<4x1xf32, #tpu.memory_space<vmem>>, vector<4x1xf32>
    %33 = arith.addf %32, %31 : vector<4x1xf32>
    %c0_19 = arith.constant 0 : index
    %c0_20 = arith.constant 0 : index
    %34 = vector.load %arg7[%c0_19, %c0_20] : memref<4x1xf32, #tpu.memory_space<vmem>>, vector<4x1xf32>
    tpu.vector_store %arg7[%c0_19, %c0_20], %33 {strides = array<i32>} : memref<4x1xf32, #tpu.memory_space<vmem>>, vector<4x1xf32>,
    return
  }
  func.func @transform_0(%arg0: i32) -> (i32, i32) {
    %c0_i32 = arith.constant 0 : i32
    %c0_i32_0 = arith.constant 0 : i32
    %c0_i32_1 = arith.constant 0 : i32
    return %c0_i32, %c0_i32_0 : i32, i32
  }
  func.func @transform_1(%arg0: i32) -> (i32, i32) {
    %c0_i32 = arith.constant 0 : i32
    %c0_i32_0 = arith.constant 0 : i32
    %c0_i32_1 = arith.constant 0 : i32
    return %c0_i32, %c0_i32_0 : i32, i32
  }
  func.func @transform_2(%arg0: i32) -> (i32, i32) {
    %c0_i32 = arith.constant 0 : i32
    %c0_i32_0 = arith.constant 0 : i32
    %c0_i32_1 = arith.constant 0 : i32
    return %c0_i32, %c0_i32_0 : i32, i32
  }
  func.func @transform_3(%arg0: i32) -> (i32, i32) {
    %c0_i32 = arith.constant 0 : i32
    %c0_i32_0 = arith.constant 0 : i32
    return %c0_i32, %arg0 : i32, i32
  }
  func.func @transform_4(%arg0: i32) -> (i32, i32) {
    %c0_i32 = arith.constant 0 : i32
    %c0_i32_0 = arith.constant 0 : i32
    return %c0_i32, %arg0 : i32, i32
  }
  func.func @transform_5(%arg0: i32) -> (i32, i32) {
    %c0_i32 = arith.constant 0 : i32
    %c0_i32_0 = arith.constant 0 : i32
    return %c0_i32, %arg0 : i32, i32
  }
  func.func @transform_6(%arg0: i32) -> (i32, i32) {
    %c0_i32 = arith.constant 0 : i32
    %c0_i32_0 = arith.constant 0 : i32
    %c0_i32_1 = arith.constant 0 : i32
    return %c0_i32, %c0_i32_0 : i32, i32
  }
}

</mosaic_0001>

<llo_original>
// kernel: tpu_custom_call.1
$region0: #{tpu_custom_call.1}
  #allocation0 [shape = 'u32[]', space=smem, size = 0x4, offset = 0x4, fixed_abs, tag = 'smem constant byte address 0x4 - core index']
  #allocation1 [shape = 'u32[144,128]{1,0:T(1,128)}', space=vmem, size = 0x12000, scoped, tag = 'internal scratch']
  #allocation2 [shape = 's32[4,128]{1,0:T(4,128)}', space=vmem, size = 0x800, scoped, tag = 'scratch operand']
  #allocation3 [shape = 'f32[1,1]{1,0:T(1,128)S(1)}', space=vmem, size = 0x200, scoped, tag = 'scoped memory for tpu_custom_call.1']
  #allocation4 [shape = 'f32[1,1]{1,0:T(1,128)S(1)}', space=vmem, size = 0x200, scoped, tag = 'scoped memory for tpu_custom_call.1']
  %s0 = inlined_call_operand.<no memory space> [shape: f32[1,1], index: 0, kind: input, shape index: {}]
  %s1 = inlined_call_operand.<no memory space> [shape: f32[1,1], index: 1, kind: input, shape index: {}]
  %s2 = inlined_call_operand.vmem [shape: f32[10,1], index: 2, kind: input, shape index: {}]
  %s3 = inlined_call_operand.vmem [shape: f32[1,128], index: 3, kind: input, shape index: {}]
  %s4 = inlined_call_operand.vmem [shape: s32[1,128], index: 4, kind: input, shape index: {}]
  %s5 = inlined_call_operand.vmem [shape: s32[1,128], index: 5, kind: input, shape index: {}]
  %s6 = inlined_call_operand.vmem [shape: f32[4,1], index: 6, kind: output, shape index: {}]
  %s7 = sld [smem:[#allocation0]]
  $region38: #{tpu_custom_call.1} parent=0
    _
  %s9 = ssub.s32 1, %s7
  %s10 = scalar_select 0, %s9, %s7
  %v11 = vstv %s0
  %12 = vst [vmem:[#allocation3] sm:$0x1] %v11
  %v13 = vstv %s1
  %14 = vst [vmem:[#allocation4] sm:$0x1] %v13
  // Predicated region
  $region2: #{tpu_custom_call.1} parent=0 // pred_check
    _
  $region3: #{tpu_custom_call.1} parent=0 // pred_check_branch
    %16 = sbr.rel (0) target = $region5
  $region4: #{tpu_custom_call.1} parent=0 // pred_region
    _
  $region5: #{tpu_custom_call.1} parent=0 // pred_fallthru
    _
  // Predicated region
  $region6: #{tpu_custom_call.1} parent=0 // pred_check
    _
  $region7: #{tpu_custom_call.1} parent=0 // pred_check_branch
    %18 = sbr.rel (0) target = $region9
  $region8: #{tpu_custom_call.1} parent=0 // pred_region
    _
  $region9: #{tpu_custom_call.1} parent=0 // pred_fallthru
    _
  // Predicated region
  $region10: #{tpu_custom_call.1} parent=0 // pred_check
    _
  $region11: #{tpu_custom_call.1} parent=0 // pred_check_branch
    %20 = sbr.rel (0) target = $region13
  $region12: #{tpu_custom_call.1} parent=0 // pred_region
    _
  $region13: #{tpu_custom_call.1} parent=0 // pred_fallthru
    _
  // Predicated region
  $region14: #{tpu_custom_call.1} parent=0 // pred_check
    _
  $region15: #{tpu_custom_call.1} parent=0 // pred_check_branch
    %22 = sbr.rel (0) target = $region17
  $region16: #{tpu_custom_call.1} parent=0 // pred_region
    _
  $region17: #{tpu_custom_call.1} parent=0 // pred_fallthru
    _
  // Predicated region
  $region18: #{tpu_custom_call.1} parent=0 // pred_check
    _
  $region19: #{tpu_custom_call.1} parent=0 // pred_check_branch
    %24 = sbr.rel (0) target = $region21
  $region20: #{tpu_custom_call.1} parent=0 // pred_region
    _
  $region21: #{tpu_custom_call.1} parent=0 // pred_fallthru
    _
  // Predicated region
  $region22: #{tpu_custom_call.1} parent=0 // pred_check
    _
  $region23: #{tpu_custom_call.1} parent=0 // pred_check_branch
    %26 = sbr.rel (0) target = $region25
  $region24: #{tpu_custom_call.1} parent=0 // pred_region
    _
  $region25: #{tpu_custom_call.1} parent=0 // pred_fallthru
    _
  %p27 = scmp.eq.s32.totalorder 0, 0
  // Predicated region
  $region26: #{tpu_custom_call.1} parent=0 // pred_check
    %p28 = pneg %p27
  $region27: #{tpu_custom_call.1} parent=0 // pred_check_branch
    %30 = sbr.rel (%p28) target = $region29
  $region28: #{tpu_custom_call.1} parent=0 // pred_region
    %vm31 = vcmask 3072
    %32 = vst.msk [vmem:[%s6] sm:$0xf] %vm31, 0.0
    %v33 = vlaneseq
    %v34 = vshrl.u32 %v33, 7
    %35 = vst [vmem:[#allocation2] sm:$0xf] %v34
  $region29: #{tpu_custom_call.1} parent=0 // pred_fallthru
    _
  %v36 = vld [vmem:[%s4] sm:$0x1]
  %v37 = vlaneseq
  %v38 = vshrl.u32 %v37, 7
  %v39 = vadd.s32 %v38, 8
  %v40 = vlaneseq
  %v41 = vshrl.u32 %v40, 7
  %v42 = vsub.s32 0, %v41
  %v43 = vrot.slane %v36, %v42
  %vm44 = vcmp.eq.s32.totalorder %v43, %v38
  %vm45 = vcmp.eq.s32.totalorder %v43, %v39
  %v46 = vld [vmem:[%s2] sm:$0xff]
  %v47 = vld [vmem:[%s2 + $0x8] sm:$0x3]
  %49 = vset.pattern.permute.xlu0 0
  %50 = vperm.xlu0 %49, %v46
  %v51 = vpop.permute.xlu0 %50
  %54 = vset.pattern.permute.xlu0 0
  %55 = vperm.xlu0 %54, %v47
  %v56 = vpop.permute.xlu0 %55
  %v58 = vsel %vm44, %v51, 0.0
  %v59 = vsel %vm45, %v56, 0.0
  %vm60 = vcmask 1041408
  %v61 = vsel %vm60, %v59, 0.0
  %v62 = vadd.f32 %v58, %v61
  %v63 = vrot.slane %v62, 4
  %v64 = vadd.f32 %v62, %v63
  %v65 = vrot.slane %v64, 2
  %v66 = vadd.f32 %v64, %v65
  %v67 = vrot.slane %v66, 1
  %v68 = vadd.f32 %v66, %v67
  %v69 = vld [vmem:[%s3] sm:$0x1]
  %v70 = vld [vmem:[#allocation3] sm:$0x1]
  %72 = vset.pattern.permute.xlu0 0
  %73 = vperm.xlu0 %72, %v70
  %v74 = vpop.permute.xlu0 %73
  %v76 = vlaneseq
  %v77 = vshrl.u32 %v76, 7
  %v78 = vsub.s32 0, %v77
  %v79 = vrot.slane %v74, %v78
  %v80 = vmul.f32 %v69, %v79
  %v81 = vld [vmem:[#allocation4] sm:$0x1]
  %83 = vset.pattern.permute.xlu0 0
  %84 = vperm.xlu0 %83, %v81
  %v85 = vpop.permute.xlu0 %84
  %v87 = vlaneseq
  %v88 = vshrl.u32 %v87, 7
  %v89 = vsub.s32 0, %v88
  %v90 = vrot.slane %v85, %v89
  %v91 = vadd.f32 %v80, %v90
  %v92 = vadd.f32 %v91, %v68
  %v93 = vld [vmem:[%s5] sm:$0x1]
  %v94 = vld [vmem:[#allocation2] sm:$0xf]
  %v95 = vlaneseq
  %v96 = vshrl.u32 %v95, 7
  %v97 = vsub.s32 0, %v96
  %v98 = vrot.slane %v93, %v97
  %vm99 = vcmp.eq.s32.totalorder %v98, %v94
  %v101 = vlaneseq
  %v102 = vshrl.u32 %v101, 7
  %v103 = vsub.s32 0, %v102
  %v104 = vrot.slane %v92, %v103
  %v106 = vsel %vm99, %v104, 0.0
  %vm107 = vcmask 1043456
  %v108 = vsel %vm107, %v106, 0.0
  %109 = vadd.xlane.f32.xlu0 %v108
  %v110 = vpop.xlane.xlu0 %109
  %v111 = vld [vmem:[%s6] sm:$0xf]
  %v112 = vadd.f32 %v111, %v110
  %vm113 = vcmask 3072
  %114 = vst.msk [vmem:[%s6] sm:$0xf] %vm113, %v112
  // Predicated region
  $region30: #{tpu_custom_call.1} parent=0 // pred_check
    _
  $region31: #{tpu_custom_call.1} parent=0 // pred_check_branch
    %116 = sbr.rel (0) target = $region33
  $region32: #{tpu_custom_call.1} parent=0 // pred_region
    _
  $region33: #{tpu_custom_call.1} parent=0 // pred_fallthru
    _
  // Predicated region
  $region34: #{tpu_custom_call.1} parent=0 // pred_check
    _
  $region35: #{tpu_custom_call.1} parent=0 // pred_check_branch
    %118 = sbr.rel (0) target = $region37
  $region36: #{tpu_custom_call.1} parent=0 // pred_region
    _
  $region37: #{tpu_custom_call.1} parent=0 // pred_fallthru
    _

</llo_original>
